<compile_context>
chip_gen: v7x
topology: tpu7x:2x2x1
jax: 0.10.0
libtpu: 0.0.40
codegen_flags: <defaults>
</compile_context>

<pallas_src>
import functools

import jax
import jax.numpy as jnp
from jax.experimental import pallas as pl
from jax.experimental.pallas import tpu as pltpu


def _round_up(x, m):
    return (x + m - 1) // m * m


def _tpu_generation():
    """Best-effort TPU generation (5/6/7...); defaults to 6 if unknown."""
    try:
        dev = jax.devices()[0]
        if dev.platform != "tpu":
            return 6
        kind = dev.device_kind.lower()
        for g in (7, 6, 5, 4):
            if f"v{g}" in kind:
                return g
    except Exception:
        pass
    return 6


def _choose_tile_m(M, gen, other_parallel_ge2):
    """Row-tile size: 512 (1024 for large M); keep >=2 M steps on v7x."""
    base = 1024 if M >= 8192 else 512
    tm = min(base, _round_up(M, 128))
    if gen >= 7 and not other_parallel_ge2:
        # v7x has 2 TensorCores sharded over the parallel grid axes; avoid
        # collapsing every parallel axis to extent 1.
        while tm > 128 and _round_up(M, tm) // tm < 2:
            tm = max(128, _round_up(tm // 2, 128))
    return tm


def _choose_tile_k(kp, cap=1024):
    """Largest multiple-of-128 divisor of kp, capped (kp is a 128 multiple)."""
    best = 128
    t = 256
    while t <= min(kp, cap):
        if kp % t == 0:
            best = t
        t += 128
    return best


# ---------------------------------------------------------------------------
# Kernels
# ---------------------------------------------------------------------------
def _mm_acc_kernel(x_ref, w_ref, shift_ref, o_ref, acc_ref, *, relu):
    """Wide path, multi-K-step: f32 VMEM accumulator + last-step epilogue."""
    k = pl.program_id(2)

    @pl.when(k == 0)
    def _():
        acc_ref[...] = jnp.zeros_like(acc_ref)

    # bf16 x bf16 -> f32 accumulate: native single-pass MXU path.
    acc_ref[...] += jnp.dot(x_ref[...], w_ref[...],
                            preferred_element_type=jnp.float32)

    @pl.when(k == pl.num_programs(2) - 1)
    def _():
        y = acc_ref[...] + shift_ref[...]          # f32 epilogue (VPU)
        if relu:
            y = jnp.maximum(y, 0.0)
        o_ref[...] = y.astype(o_ref.dtype)


def _mm_single_kernel(x_ref, w_ref, shift_ref, o_ref, *, relu):
    """Wide path, single K step: no scratch accumulator, no pl.when phases."""
    y = jnp.dot(x_ref[...], w_ref[...],
                preferred_element_type=jnp.float32) + shift_ref[...]
    if relu:
        y = jnp.maximum(y, 0.0)
    o_ref[...] = y.astype(o_ref.dtype)


def _mm_narrow_kernel(w_ref, x_ref, shift_ref, o_ref, *, relu):
    """Small-Cout path: (Cout, M) = W^T @ X^T; lane axis = M (dense stores)."""
    y = jnp.dot(w_ref[...], x_ref[...],
                preferred_element_type=jnp.float32) + shift_ref[...]
    if relu:
        y = jnp.maximum(y, 0.0)
    o_ref[...] = y.astype(o_ref.dtype)


# ---------------------------------------------------------------------------
# Wrapper
# ---------------------------------------------------------------------------
def conv_block(x_nchw, weight_oihw, bias, *, bn_params=None, relu=True,
               stride=1, groups=1):
    """ConvBlock forward. x_nchw: (N, Cin, H, W) -> (N, Cout, H, W)."""
    # TODO(synk): only stride=1, groups=1 (the module defaults) are implemented.
    assert stride == 1 and groups == 1
    N, Cin, H, W = x_nchw.shape
    Cout, Cin_w, KH, KW = weight_oihw.shape
    assert Cin_w == Cin
    # padding=(k-1)//2 gives "same" output only for odd square kernels.
    assert KH == KW and KH % 2 == 1
    pad = (KH - 1) // 2

    gen = _tpu_generation()
    out_dtype = x_nchw.dtype
    vmem_limit = (48 if gen >= 7 else 64) * 1024 * 1024

    # --- fuse bias + eval-mode BN into per-channel scale/shift; fold the scale
    # into the weights so the kernel epilogue is just add + ReLU.
    if bn_params is not None:
        gamma, beta, mean, var, eps = bn_params
        scale = gamma.astype(jnp.float32) / jnp.sqrt(var.astype(jnp.float32) + eps)
        shift = (bias.astype(jnp.float32) - mean.astype(jnp.float32)) * scale \
            + beta.astype(jnp.float32)
    else:
        scale = jnp.ones((Cout,), jnp.float32)
        shift = bias.astype(jnp.float32)
    w_f32 = weight_oihw.astype(jnp.float32) * scale.reshape(Cout, 1, 1, 1)

    # --- glue: NHWC, cast to bf16 BEFORE im2col (halves glue HBM traffic).
    # TODO(synk): for large Cin a direct conv (KH*KW tap axis in the grid over
    # the padded NHWC input) would avoid the 9x im2col slab; im2col is kept
    # here since ConvBlock channel counts in this network are small/moderate.
    x = jnp.transpose(x_nchw, (0, 2, 3, 1)).astype(jnp.bfloat16)
    xp = jnp.pad(x, ((0, 0), (pad, pad), (pad, pad), (0, 0)))
    taps = [xp[:, ky:ky + H, kx:kx + W, :]
            for ky in range(KH) for kx in range(KW)]
    K = KH * KW * Cin
    M = N * H * W
    x_col = jnp.concatenate(taps, axis=-1).reshape(M, K)   # tap order (ky,kx,cin)

    narrow = (Cout <= 64) and (K <= 4096)

    if narrow:
        # ---- small-Cout transposed orientation: out (Cout, M) = W^T @ X^T ----
        kp = _round_up(K, 16)                   # bf16 sublane packing
        cout_p = _round_up(Cout, 8)             # f32 sublane minimum, not 128
        tile_m = _choose_tile_m(M, gen, other_parallel_ge2=False)
        mp = _round_up(M, tile_m)

        xt = jnp.pad(x_col.T, ((0, kp - K), (0, mp - M)))            # (kp, mp) bf16
        wt = jnp.pad(
            jnp.transpose(w_f32, (0, 2, 3, 1)).reshape(Cout, K).astype(jnp.bfloat16),
            ((0, cout_p - Cout), (0, kp - K)))                       # (cout_p, kp)
        sh = jnp.pad(shift, (0, cout_p - Cout)).reshape(cout_p, 1)   # (cout_p, 1)

        kernel = functools.partial(_mm_narrow_kernel, relu=relu)
        out2d = pl.pallas_call(
            kernel,
            out_shape=jax.ShapeDtypeStruct((cout_p, mp), out_dtype),
            grid_spec=pltpu.PrefetchScalarGridSpec(
                num_scalar_prefetch=0,
                grid=(mp // tile_m,),
                in_specs=[
                    pl.BlockSpec((cout_p, kp), lambda j: (0, 0)),
                    pl.BlockSpec((kp, tile_m), lambda j: (0, j)),
                    pl.BlockSpec((cout_p, 1), lambda j: (0, 0)),
                ],
                out_specs=pl.BlockSpec((cout_p, tile_m), lambda j: (0, j)),
            ),
            compiler_params=pltpu.CompilerParams(
                dimension_semantics=("parallel",),
                vmem_limit_bytes=vmem_limit,
            ),
        )(wt, xt, sh)

        out = out2d[:Cout, :M].reshape(Cout, N, H, W)
        return jnp.transpose(out, (1, 0, 2, 3))

    # ---- wide path: out (M, Cout) = X_col @ W, lane-dense Cout tiles ----
    tile_n = 256 if (gen >= 6 and Cout > 128) else 128    # v6e/v7x 256-wide MXU
    cout_p = _round_up(Cout, tile_n)
    kp = _round_up(K, 128)
    tile_k = _choose_tile_k(kp)
    n_parallel_ge2 = (cout_p // tile_n) >= 2
    tile_m = _choose_tile_m(M, gen, other_parallel_ge2=n_parallel_ge2)
    mp = _round_up(M, tile_m)

    xw = jnp.pad(x_col, ((0, mp - M), (0, kp - K)))                  # (mp, kp) bf16
    ww = jnp.pad(
        jnp.transpose(w_f32, (2, 3, 1, 0)).reshape(K, Cout).astype(jnp.bfloat16),
        ((0, kp - K), (0, cout_p - Cout)))                           # (kp, cout_p)
    sh = jnp.pad(shift, (0, cout_p - Cout)).reshape(1, cout_p)       # (1, cout_p)

    n_k = kp // tile_k
    if n_k == 1:
        # Single K step: dot + epilogue straight into o_ref, no accumulator.
        kernel = functools.partial(_mm_single_kernel, relu=relu)
        out2d = pl.pallas_call(
            kernel,
            out_shape=jax.ShapeDtypeStruct((mp, cout_p), out_dtype),
            grid_spec=pltpu.PrefetchScalarGridSpec(
                num_scalar_prefetch=0,
                grid=(mp // tile_m, cout_p // tile_n),
                in_specs=[
                    pl.BlockSpec((tile_m, kp), lambda i, j: (i, 0)),
                    pl.BlockSpec((kp, tile_n), lambda i, j: (0, j)),
                    pl.BlockSpec((1, tile_n), lambda i, j: (0, j)),
                ],
                out_specs=pl.BlockSpec((tile_m, tile_n), lambda i, j: (i, j)),
            ),
            compiler_params=pltpu.CompilerParams(
                dimension_semantics=("parallel", "parallel"),
                vmem_limit_bytes=vmem_limit,
            ),
        )(xw, ww, sh)
    else:
        # TODO(synk): if profiling shows exposed weight DMA on v5e, add
        # pipeline_mode=pl.Buffered(3) to the weight BlockSpec.
        kernel = functools.partial(_mm_acc_kernel, relu=relu)
        out2d = pl.pallas_call(
            kernel,
            out_shape=jax.ShapeDtypeStruct((mp, cout_p), out_dtype),
            grid_spec=pltpu.PrefetchScalarGridSpec(
                num_scalar_prefetch=0,
                grid=(mp // tile_m, cout_p // tile_n, n_k),
                in_specs=[
                    pl.BlockSpec((tile_m, tile_k), lambda i, j, k: (i, k)),
                    pl.BlockSpec((tile_k, tile_n), lambda i, j, k: (k, j)),
                    pl.BlockSpec((1, tile_n), lambda i, j, k: (0, j)),
                ],
                out_specs=pl.BlockSpec((tile_m, tile_n), lambda i, j, k: (i, j)),
                scratch_shapes=[pltpu.VMEM((tile_m, tile_n), jnp.float32)],
            ),
            compiler_params=pltpu.CompilerParams(
                dimension_semantics=("parallel", "parallel", "arbitrary"),
                vmem_limit_bytes=vmem_limit,
            ),
        )(xw, ww, sh)

    out = out2d[:M, :Cout].reshape(N, H, W, Cout)
    return jnp.transpose(out, (0, 3, 1, 2))


# ---------------------------------------------------------------------------
# Reference + test
# ---------------------------------------------------------------------------
def _reference(x_nchw, weight_oihw, bias, bn_params=None, relu=True):
    y = jax.lax.conv_general_dilated(
        x_nchw.astype(jnp.float32), weight_oihw.astype(jnp.float32),
        window_strides=(1, 1), padding="SAME",
        dimension_numbers=("NCHW", "OIHW", "NCHW"))
    y = y + bias.reshape(1, -1, 1, 1)
    if bn_params is not None:
        gamma, beta, mean, var, eps = bn_params
        y = gamma.reshape(1, -1, 1, 1) * (y - mean.reshape(1, -1, 1, 1)) \
            / jnp.sqrt(var.reshape(1, -1, 1, 1) + eps) + beta.reshape(1, -1, 1, 1)
    if relu:
        y = jnp.maximum(y, 0.0)
    return y


if __name__ == "__main__":
    key = jax.random.PRNGKey(0)
    k1, k2, k3, k4, k5, k6, k7, k8, k9 = jax.random.split(key, 9)

    # --- ConvBlock(inp_dim=4, out_dim=8): 3x3, stride 1, bn=False, relu=True
    #     (exercises the small-Cout transposed path)
    N, Cin, Cout, H, W = 2, 4, 8, 16, 16
    x = jax.random.normal(k1, (N, Cin, H, W), dtype=jnp.float32)
    weight = jax.random.normal(k2, (Cout, Cin, 3, 3), dtype=jnp.float32) * 0.1
    bias = jax.random.normal(k3, (Cout,), dtype=jnp.float32) * 0.1

    out = jax.block_until_ready(conv_block(x, weight, bias, relu=True))
    ref = _reference(x, weight, bias, relu=True)
    assert out.shape == (N, Cout, H, W)
    # bf16 MXU operands with f32 accumulation -> loosened tolerance vs f32 ref.
    assert jnp.allclose(out, ref, atol=2e-2, rtol=2e-2), "narrow-path mismatch"

    # --- wide path, single K step, with eval-mode BN fused
    N2, Cin2, Cout2, H2, W2 = 1, 16, 160, 8, 8
    x2 = jax.random.normal(k4, (N2, Cin2, H2, W2), dtype=jnp.float32)
    w2 = jax.random.normal(k5, (Cout2, Cin2, 3, 3), dtype=jnp.float32) * 0.05
    b2 = jax.random.normal(k6, (Cout2,), dtype=jnp.float32) * 0.1
    bn2 = (jnp.full((Cout2,), 1.3, jnp.float32), jnp.full((Cout2,), 0.05, jnp.float32),
           jnp.full((Cout2,), 0.02, jnp.float32), jnp.full((Cout2,), 0.9, jnp.float32),
           1e-5)
    out2 = jax.block_until_ready(
        conv_block(x2, w2, b2, bn_params=bn2, relu=True))
    ref2 = _reference(x2, w2, b2, bn_params=bn2, relu=True)
    assert jnp.allclose(out2, ref2, atol=2e-2, rtol=2e-2), "wide single-K mismatch"

    # --- wide path, multi-K-step accumulator kernel
    N3, Cin3, Cout3, H3, W3 = 1, 128, 96, 8, 8
    x3 = jax.random.normal(k7, (N3, Cin3, H3, W3), dtype=jnp.float32)
    w3 = jax.random.normal(k8, (Cout3, Cin3, 3, 3), dtype=jnp.float32) * 0.05
    b3 = jax.random.normal(k9, (Cout3,), dtype=jnp.float32) * 0.1
    out3 = jax.block_until_ready(conv_block(x3, w3, b3, relu=True))
    ref3 = _reference(x3, w3, b3, relu=True)
    assert jnp.allclose(out3, ref3, atol=2e-2, rtol=2e-2), "wide multi-K mismatch"

    print("KERNEL_OK")
</pallas_src>

<mosaic_0001>
module attributes {stable_mosaic.version = 11 : i64} {
  func.func @_mm_narrow_kernel(%arg0: i32, %arg1: memref<8x48xbf16, #tpu.memory_space<vmem>>, %arg2: memref<48x512xbf16, #tpu.memory_space<vmem>>, %arg3: memref<8x1xf32, #tpu.memory_space<vmem>>, %arg4: memref<8x512xf32, #tpu.memory_space<vmem>>) attributes {dimension_semantics = [#tpu.dimension_semantics<parallel>], iteration_bounds = array<i64: 1>, scalar_prefetch = 0 : i64, scratch_operands = 0 : i64, tpu.core_type = #tpu.core_type<tc>, window_params = [{pipeline_mode = #tpu.pipeline_mode<synchronous>, transform_indices = @transform_0, window_bounds = array<i64: 8, 48>}, {transform_indices = @transform_1, window_bounds = array<i64: 48, 512>}, {pipeline_mode = #tpu.pipeline_mode<synchronous>, transform_indices = @transform_2, window_bounds = array<i64: 8, 1>}, {transform_indices = @transform_3, window_bounds = array<i64: 8, 512>}]} {
    %c0 = arith.constant 0 : index
    %c0_0 = arith.constant 0 : index
    %0 = vector.load %arg1[%c0, %c0_0] : memref<8x48xbf16, #tpu.memory_space<vmem>>, vector<8x48xbf16>
    %c0_1 = arith.constant 0 : index
    %c0_2 = arith.constant 0 : index
    %1 = vector.load %arg2[%c0_1, %c0_2] : memref<48x512xbf16, #tpu.memory_space<vmem>>, vector<48x512xbf16>
    %cst = arith.constant dense<0.000000e+00> : vector<8x512xf32>
    %2 = tpu.matmul %0, %1, %cst {dimension_numbers = #tpu.dot_dimension_numbers<[1], [0], [0], [1], [0, 0, 1, 1], [], []>} : vector<8x48xbf16>, vector<48x512xbf16>, vector<8x512xf32> -> vector<8x512xf32>
    %c0_3 = arith.constant 0 : index
    %c0_4 = arith.constant 0 : index
    %3 = vector.load %arg3[%c0_3, %c0_4] : memref<8x1xf32, #tpu.memory_space<vmem>>, vector<8x1xf32>
    %4 = vector.broadcast %3 : vector<8x1xf32> to vector<8x512xf32>
    %5 = arith.addf %2, %4 : vector<8x512xf32>
    %cst_5 = arith.constant 0.000000e+00 : f32
    %6 = vector.broadcast %cst_5 : f32 to vector<8x512xf32>
    %7 = arith.maximumf %5, %6 : vector<8x512xf32>
    %c0_6 = arith.constant 0 : index
    %c0_7 = arith.constant 0 : index
    %8 = vector.load %arg4[%c0_6, %c0_7] : memref<8x512xf32, #tpu.memory_space<vmem>>, vector<8x512xf32>
    tpu.vector_store %arg4[%c0_6, %c0_7], %7 {strides = array<i32>} : memref<8x512xf32, #tpu.memory_space<vmem>>, vector<8x512xf32>,
    return
  }
  func.func @transform_0(%arg0: i32) -> (i32, i32) {
    %c0_i32 = arith.constant 0 : i32
    %c0_i32_0 = arith.constant 0 : i32
    %c0_i32_1 = arith.constant 0 : i32
    return %c0_i32, %c0_i32_0 : i32, i32
  }
  func.func @transform_1(%arg0: i32) -> (i32, i32) {
    %c0_i32 = arith.constant 0 : i32
    %c0_i32_0 = arith.constant 0 : i32
    return %c0_i32, %arg0 : i32, i32
  }
  func.func @transform_2(%arg0: i32) -> (i32, i32) {
    %c0_i32 = arith.constant 0 : i32
    %c0_i32_0 = arith.constant 0 : i32
    %c0_i32_1 = arith.constant 0 : i32
    return %c0_i32, %c0_i32_0 : i32, i32
  }
  func.func @transform_3(%arg0: i32) -> (i32, i32) {
    %c0_i32 = arith.constant 0 : i32
    %c0_i32_0 = arith.constant 0 : i32
    return %c0_i32, %arg0 : i32, i32
  }
}

</mosaic_0001>

<llo_original>
// kernel: tpu_custom_call.1
$region0: #{tpu_custom_call.1}
  #allocation0 [shape = 'u32[]', space=smem, size = 0x4, offset = 0x4, fixed_abs, tag = 'smem constant byte address 0x4 - core index']
  #allocation1 [shape = 'u32[144,128]{1,0:T(1,128)}', space=vmem, size = 0x12000, scoped, tag = 'internal scratch']
  %s0 = inlined_call_operand.hbm [shape: bf16[8,48], index: 0, kind: input, shape index: {}]
  %s1 = inlined_call_operand.hbm [shape: bf16[48,512], index: 1, kind: input, shape index: {}]
  %s2 = inlined_call_operand.hbm [shape: f32[8,1], index: 2, kind: input, shape index: {}]
  %s3 = inlined_call_operand.hbm [shape: f32[8,512], index: 3, kind: output, shape index: {}]
  %s4 = sld [smem:[#allocation0]]
  $region34: #{tpu_custom_call.1} parent=0
    _
  %s6 = ssub.s32 1, %s4
  %s7 = scalar_select 0, %s6, %s4
  $region1: #{tpu_custom_call.1} parent=0
    #allocation2 [shape = 'u8[2048]{0}', space=vmem, size = 0x800, scoped, tag = 'input window, operand 0, single buffered']
    #allocation3 [shape = 's32[1]{0}', space=sflag, size = 0x4, scoped, tag = 'scoped memory for tpu_custom_call.1']
    #allocation4 [shape = 's32[1]{0}', space=sflag, size = 0x4, scoped, tag = 'scoped memory for tpu_custom_call.1']
    #allocation5 [shape = 'u8[49152]{0}', space=vmem, size = 0xc000, scoped, tag = 'input window, operand 1, single buffered']
    #allocation6 [shape = 's32[1]{0}', space=sflag, size = 0x4, scoped, tag = 'scoped memory for tpu_custom_call.1']
    #allocation7 [shape = 'u8[4096]{0}', space=vmem, size = 0x1000, scoped, tag = 'input window, operand 2, single buffered']
    #allocation8 [shape = 'u8[16384]{0}', space=vmem, size = 0x4000, scoped, tag = 'output window, operand 0, single buffered']
    %8 = vsyncpa [#allocation3], 0
    %9 = vsyncpa [#allocation6], 0
    %10 = vsyncpa [#allocation4], 0
    // Predicated region
    $region2: #{tpu_custom_call.1} parent=1 // pred_check
      _
    $region3: #{tpu_custom_call.1} parent=1 // pred_check_branch
      %12 = sbr.rel (0) target = $region5
    $region4: #{tpu_custom_call.1} parent=1 // pred_region
      %s14 = ssub.s32 64, 64
      %15 = vsyncadd [#allocation3], %s14
      %s17 = sshll.u32 [#allocation2], 4
      %s18 = int_to_ptr.vmem [resolvable:$true] %s17
      %20 = dma.hbm_to_vmem [thread:$0]  %s0, 64, %s18, [#allocation3]
    $region5: #{tpu_custom_call.1} parent=1 // pred_fallthru
      _
    // Predicated region
    $region6: #{tpu_custom_call.1} parent=1 // pred_check
      _
    $region7: #{tpu_custom_call.1} parent=1 // pred_check_branch
      %22 = sbr.rel (0) target = $region9
    $region8: #{tpu_custom_call.1} parent=1 // pred_region
      %s24 = ssub.s32 1536, 1536
      %25 = vsyncadd [#allocation6], %s24
      %s26 = sshll.u32 [#allocation5], 4
      %s27 = int_to_ptr.vmem [resolvable:$true] %s26
      %32 = dma.hbm_to_vmem [thread:$0]  %s1, 1536, %s27, [#allocation6], 256, 256, 16
    $region9: #{tpu_custom_call.1} parent=1 // pred_fallthru
      _
    // Predicated region
    $region10: #{tpu_custom_call.1} parent=1 // pred_check
      _
    $region11: #{tpu_custom_call.1} parent=1 // pred_check_branch
      %34 = sbr.rel (0) target = $region13
    $region12: #{tpu_custom_call.1} parent=1 // pred_region
      %s36 = ssub.s32 128, 128
      %37 = vsyncadd [#allocation6], %s36
      %s39 = sshll.u32 [#allocation7], 4
      %s40 = int_to_ptr.vmem [resolvable:$true] %s39
      %42 = dma.hbm_to_vmem [thread:$0]  %s2, 128, %s40, [#allocation6]
    $region13: #{tpu_custom_call.1} parent=1 // pred_fallthru
      _
    // Predicated region
    $region14: #{tpu_custom_call.1} parent=1 // pred_check
      _
    $region15: #{tpu_custom_call.1} parent=1 // pred_check_branch
      %44 = sbr.rel (0) target = $region17
    $region16: #{tpu_custom_call.1} parent=1 // pred_region
      %45 = dma.done [#allocation3], 64
    $region17: #{tpu_custom_call.1} parent=1 // pred_fallthru
      _
    // Predicated region
    $region18: #{tpu_custom_call.1} parent=1 // pred_check
      _
    $region19: #{tpu_custom_call.1} parent=1 // pred_check_branch
      %47 = sbr.rel (0) target = $region21
    $region20: #{tpu_custom_call.1} parent=1 // pred_region
      %48 = dma.done [#allocation6], 1536
    $region21: #{tpu_custom_call.1} parent=1 // pred_fallthru
      _
    // Predicated region
    $region22: #{tpu_custom_call.1} parent=1 // pred_check
      _
    $region23: #{tpu_custom_call.1} parent=1 // pred_check_branch
      %50 = sbr.rel (0) target = $region25
    $region24: #{tpu_custom_call.1} parent=1 // pred_region
      %51 = dma.done [#allocation6], 128
    $region25: #{tpu_custom_call.1} parent=1 // pred_fallthru
      _
    %v53 = vld [vmem:[#allocation2] sm:$0xf]
    %v54 = vld [vmem:[#allocation5] sm:$0xff]
    %v55 = vld [vmem:[#allocation5 + $0x8] sm:$0xff]
    %v56 = vld [vmem:[#allocation5 + $0x10] sm:$0xff]
    %v57 = vld [vmem:[#allocation5 + $0x18] sm:$0xff]
    %v58 = vld [vmem:[#allocation5 + $0x20] sm:$0xff]
    %v59 = vld [vmem:[#allocation5 + $0x28] sm:$0xff]
    %v60 = vld [vmem:[#allocation5 + $0x30] sm:$0xff]
    %v61 = vld [vmem:[#allocation5 + $0x38] sm:$0xff]
    %v62 = vld [vmem:[#allocation5 + $0x40] sm:$0xff]
    %v63 = vld [vmem:[#allocation5 + $0x48] sm:$0xff]
    %v64 = vld [vmem:[#allocation5 + $0x50] sm:$0xff]
    %v65 = vld [vmem:[#allocation5 + $0x58] sm:$0xff]
    %v66 = vld [vmem:[#allocation7] sm:$0xff]
    %68 = vset.pattern.permute.xlu0 0
    %69 = vperm.xlu0 %68, %v66
    %v70 = vpop.permute.xlu0 %69
    %v84 = vunpack.c.l.b16 %v54
    %v85 = vunpack.c.h.b16 %v54
    %v86 = vunpack.c.l.b16 %v55
    %v87 = vunpack.c.h.b16 %v55
    %v88 = vunpack.c.l.b16 %v56
    %v89 = vunpack.c.h.b16 %v56
    %v90 = vunpack.c.l.b16 %v57
    %v91 = vunpack.c.h.b16 %v57
    %v92 = vunpack.c.l.b16 %v58
    %v93 = vunpack.c.h.b16 %v58
    %v94 = vunpack.c.l.b16 %v59
    %v95 = vunpack.c.h.b16 %v59
    %v96 = vunpack.c.l.b16 %v60
    %v97 = vunpack.c.h.b16 %v60
    %v98 = vunpack.c.l.b16 %v61
    %v99 = vunpack.c.h.b16 %v61
    %v100 = vunpack.c.l.b16 %v62
    %v101 = vunpack.c.h.b16 %v62
    %v102 = vunpack.c.l.b16 %v63
    %v103 = vunpack.c.h.b16 %v63
    %v104 = vunpack.c.l.b16 %v64
    %v105 = vunpack.c.h.b16 %v64
    %v106 = vunpack.c.l.b16 %v65
    %v107 = vunpack.c.h.b16 %v65
    %v108 = vpack.c.b16 %v88, %v84
    %v109 = vpack.c.b16 %v89, %v85
    %v110 = vpack.c.b16 %v90, %v86
    %v111 = vpack.c.b16 %v91, %v87
    %v112 = vpack.c.b16 %v96, %v92
    %v113 = vpack.c.b16 %v97, %v93
    %v114 = vpack.c.b16 %v98, %v94
    %v115 = vpack.c.b16 %v99, %v95
    %v116 = vpack.c.b16 %v104, %v100
    %v117 = vpack.c.b16 %v105, %v101
    %v118 = vpack.c.b16 %v106, %v102
    %v119 = vpack.c.b16 %v107, %v103
    %vm132 = vcmask 392192
    %v134 = vsel %vm132, %v53, 0
    %136 = vmatprep.subr.bf16.mxu0 %v109
    %137 = vmatpush1.bf16.msra.mxu0 %v108
    %138 = vmatprep.subr.bf16.mxu0 %v113
    %139 = vmatpush1.bf16.msra.mxu0 %v112
    %140 = vmatprep.subr.bf16.mxu0 %v117
    %141 = vmatpush1.bf16.msra.mxu0 %v116
    %142 = vmatprep.subr.bf16.mxu0 0
    %143 = vmatpush1.bf16.msra.mxu0 0
    %144 = vmatprep.subr.bf16.mxu0 0
    %145 = vmatpush1.bf16.msra.mxu0 0
    %146 = vmatprep.subr.bf16.mxu0 0
    %147 = vmatpush1.bf16.msra.mxu0 0
    %148 = vmatprep.subr.bf16.mxu0 0
    %149 = vmatpush1.bf16.msra.mxu0 0
    %150 = vmatprep.subr.bf16.mxu0 0
    %151 = vmatpush1.bf16.msra.mxu0 0
    %152 = vmatprep.subr.bf16.mxu0 0
    %153 = vmatpush1.bf16.msra.mxu0 0
    %154 = vmatprep.subr.bf16.mxu0 0
    %155 = vmatpush1.bf16.msra.mxu0 0
    %156 = vmatprep.subr.bf16.mxu0 0
    %157 = vmatpush1.bf16.msra.mxu0 0
    %158 = vmatprep.subr.bf16.mxu0 0
    %159 = vmatpush1.bf16.msra.mxu0 0
    %160 = vmatprep.subr.bf16.mxu0 0
    %161 = vmatpush1.bf16.msra.mxu0 0
    %162 = vmatprep.subr.bf16.mxu0 0
    %163 = vmatpush1.bf16.msra.mxu0 0
    %164 = vmatprep.subr.bf16.mxu0 0
    %165 = vmatpush1.bf16.msra.mxu0 0
    %166 = vmatprep.subr.bf16.mxu0 0
    %167 = vmatpush1.bf16.msra.mxu0 0
    %168 = vmatprep.mubr.bf16.mxu0 0
    %169 = vmatmul.mubr.bf16.gmra.mrb[0].mxu0 %v134
    %v170 = vpop.f32.mrb[0].mxu0
    %v171 = vadd.f32 %v70, %v170
    %v172 = vpop.f32.mrb[0].mxu0
    %v173 = vadd.f32 %v70, %v172
    %v174 = vpop.f32.mrb[0].mxu0
    %v175 = vpop.f32.mrb[0].mxu0
    %176 = vdwg.mxu0
    %177 = vmatprep.subr.bf16.mxu0 %v111
    %178 = vmatpush1.bf16.msra.mxu0 %v110
    %179 = vmatprep.subr.bf16.mxu0 %v115
    %180 = vmatpush1.bf16.msra.mxu0 %v114
    %181 = vmatprep.subr.bf16.mxu0 %v119
    %182 = vmatpush1.bf16.msra.mxu0 %v118
    %183 = vmatprep.subr.bf16.mxu0 0
    %184 = vmatpush1.bf16.msra.mxu0 0
    %185 = vmatprep.subr.bf16.mxu0 0
    %186 = vmatpush1.bf16.msra.mxu0 0
    %187 = vmatprep.subr.bf16.mxu0 0
    %188 = vmatpush1.bf16.msra.mxu0 0
    %189 = vmatprep.subr.bf16.mxu0 0
    %190 = vmatpush1.bf16.msra.mxu0 0
    %191 = vmatprep.subr.bf16.mxu0 0
    %192 = vmatpush1.bf16.msra.mxu0 0
    %193 = vmatprep.subr.bf16.mxu0 0
    %194 = vmatpush1.bf16.msra.mxu0 0
    %195 = vmatprep.subr.bf16.mxu0 0
    %196 = vmatpush1.bf16.msra.mxu0 0
    %197 = vmatprep.subr.bf16.mxu0 0
    %198 = vmatpush1.bf16.msra.mxu0 0
    %199 = vmatprep.subr.bf16.mxu0 0
    %200 = vmatpush1.bf16.msra.mxu0 0
    %201 = vmatprep.subr.bf16.mxu0 0
    %202 = vmatpush1.bf16.msra.mxu0 0
    %203 = vmatprep.subr.bf16.mxu0 0
    %204 = vmatpush1.bf16.msra.mxu0 0
    %205 = vmatprep.subr.bf16.mxu0 0
    %206 = vmatpush1.bf16.msra.mxu0 0
    %207 = vmatprep.subr.bf16.mxu0 0
    %208 = vmatpush1.bf16.msra.mxu0 0
    %209 = vmatprep.mubr.bf16.mxu0 0
    %210 = vmatmul.mubr.bf16.gmra.mrb[0].mxu0 %v134
    %v211 = vpop.f32.mrb[0].mxu0
    %v212 = vadd.f32 %v70, %v211
    %v213 = vpop.f32.mrb[0].mxu0
    %v214 = vadd.f32 %v70, %v213
    %v215 = vpop.f32.mrb[0].mxu0
    %v216 = vpop.f32.mrb[0].mxu0
    %217 = vdwg.mxu0
    %v218 = vmax.f32 %v171, 0.0
    %v219 = vmax.f32 %v173, 0.0
    %v220 = vmax.f32 %v212, 0.0
    %v221 = vmax.f32 %v214, 0.0
    %222 = vst [vmem:[#allocation8] sm:$0xff] %v218
    %223 = vst [vmem:[#allocation8 + $0x8] sm:$0xff] %v219
    %224 = vst [vmem:[#allocation8 + $0x10] sm:$0xff] %v220
    %225 = vst [vmem:[#allocation8 + $0x18] sm:$0xff] %v221
    // Predicated region
    $region26: #{tpu_custom_call.1} parent=1 // pred_check
      _
    $region27: #{tpu_custom_call.1} parent=1 // pred_check_branch
      %227 = sbr.rel (0) target = $region29
    $region28: #{tpu_custom_call.1} parent=1 // pred_region
      %s229 = ssub.s32 512, 512
      %230 = vsyncadd [#allocation4], %s229
      %s232 = sshll.u32 [#allocation8], 4
      %s233 = int_to_ptr.vmem [resolvable:$true] %s232
      %235 = dma.vmem_to_hbm [thread:$0]  %s233, 512, %s3, [#allocation4]
    $region29: #{tpu_custom_call.1} parent=1 // pred_fallthru
      _
    // Predicated region
    $region30: #{tpu_custom_call.1} parent=1 // pred_check
      _
    $region31: #{tpu_custom_call.1} parent=1 // pred_check_branch
      %237 = sbr.rel (0) target = $region33
    $region32: #{tpu_custom_call.1} parent=1 // pred_region
      %238 = dma.done [#allocation4], 512
    $region33: #{tpu_custom_call.1} parent=1 // pred_fallthru
      _
    %239 = vsyncpa [#allocation3], 1
    %240 = vsyncpa [#allocation6], 1
    %241 = vsyncpa [#allocation4], 1

</llo_original>
